<compile_context>
chip_gen: v6e
topology: v6e:2x2x1
jax: 0.10.0
libtpu: 0.0.40
codegen_flags: <defaults>
</compile_context>

<pallas_src>
import jax
import jax.numpy as jnp
import numpy as np
from jax import lax
from jax.experimental import pallas as pl
from jax.experimental.pallas import tpu as pltpu


def _critic_kernel(x_ref, mask_ref, idx_ref, w1_ref, w2_ref, out_ref):
    # x_ref:    (R, C)  row-0 slice of model_compact (rows of this grid step)
    # mask_ref: (R, 1)  int32, nonzero where current_vehicle_mask[b, 0]
    # idx_ref:  (R, K)  int32 customer indices
    # w1_ref:   (F, C)  ff_layer1.weight (torch [out, in] layout, NOT transposed)
    # w2_ref:   (C, F)  ff_layer2.weight
    # out_ref:  (R, K)  gathered critic values (float32)
    zero = jnp.zeros((), x_ref.dtype)
    x = jnp.where(mask_ref[...] != 0, zero, x_ref[...])          # compact[mask] = 0

    # relu(x @ W1^T) @ W2^T — contract on the weights' last dim (no transposes).
    dn = (((1,), (1,)), ((), ()))
    h = lax.dot_general(x, w1_ref[...], dn,
                        preferred_element_type=jnp.float32)      # (R, F) f32 acc (MXU)
    h = jnp.maximum(h, 0.0).astype(w2_ref.dtype)                 # ReLU in f32 (VPU)
    v = lax.dot_general(h, w2_ref[...], dn,
                        preferred_element_type=jnp.float32)      # (R, C) f32 acc

    # Fused gather: out[r, k] = v[r, idx[r, k]].
    # Per perf review: 2D formulation — every intermediate is an (R, C) tile,
    # one lane-reduce pass per output column (K is small/static -> unrolled).
    idx = idx_ref[...]                                           # (R, K) int32
    R, C = v.shape
    K = idx.shape[1]
    lane = lax.broadcasted_iota(jnp.int32, (R, C), 1)            # (R, C)
    cols = []
    for k in range(K):
        onehot = idx[:, k][:, None] == lane                      # (R, C) bool
        cols.append(jnp.sum(jnp.where(onehot, v, 0.0),
                            axis=-1, keepdims=True))             # (R, 1)
    out_ref[...] = jnp.concatenate(cols, axis=-1).astype(out_ref.dtype)


def critic_forward(model_compact, current_vehicle_mask, customer_index, w1, w2,
                   *, compute_dtype=jnp.float32, block_rows=None):
    """
    model_compact:        [B, S, C]
    current_vehicle_mask: [B, S]  bool (or None -> no masking)
    customer_index:       [B, K]  int  (values in [0, C); torch.gather would raise
                                        on OOB, here OOB indices yield 0)
    w1: [F, C]  (torch nn.Linear(C, F, bias=False).weight)
    w2: [C, F]  (torch nn.Linear(F, C, bias=False).weight)
    compute_dtype: jnp.float32 (default, exact-spec) or jnp.bfloat16 for the MXU
                   operands (accumulation / ReLU / gather stay f32).
    returns: [B, K] float32
    """
    B, S, C = model_compact.shape
    F = w1.shape[0]
    K = customer_index.shape[1]

    # Only S-row 0 is ever gathered -> slice it out (the cast fuses with the slice).
    x0 = model_compact[:, 0, :].astype(compute_dtype)                 # (B, C)
    if current_vehicle_mask is None:
        mask0 = jnp.zeros((B, 1), jnp.int32)
    else:
        mask0 = current_vehicle_mask[:, 0].astype(jnp.int32)[:, None]  # (B, 1)
    idx = customer_index.astype(jnp.int32)                            # (B, K)
    w1c = jnp.asarray(w1).astype(compute_dtype)                       # (F, C) as stored
    w2c = jnp.asarray(w2).astype(compute_dtype)                       # (C, F) as stored

    # Row-block size: single full block for small B (minimizes per-step overhead on
    # the single-TC v5e/v6e); >=2 blocks for larger B so the "parallel" axis can be
    # sharded across v7x's two TensorCores.  Block rows are a multiple of 8 or == B.
    if block_rows is None:
        if B < 16:
            R = B
        else:
            R = min(B, 512, max(8, ((pl.cdiv(B, 2) + 7) // 8) * 8))
    else:
        R = min(B, max(8, (block_rows // 8) * 8))
    num_blocks = pl.cdiv(B, R)

    itemsize = jnp.dtype(compute_dtype).itemsize
    weight_bytes = 2 * C * F * itemsize
    flops = 2 * B * (C * F + F * C)
    bytes_accessed = weight_bytes + B * (C * itemsize + 4 + 2 * K * 4)

    # VMEM budget: single-buffered weights + double-buffered row blocks + f32
    # matmul / gather intermediates + slack.  Explicit limit (v5e default scoped
    # VMEM is only 16 MiB).
    vmem_bytes = (weight_bytes
                  + 2 * R * (C * itemsize + 4 + 2 * K * 4)
                  + 4 * R * max(C, F) * 4
                  + (2 << 20))
    vmem_limit = int(min(max(vmem_bytes, 32 << 20), 128 << 20))

    # Constant-index weight blocks do not need double buffering.
    weight_mode = pl.Buffered(1)

    out = pl.pallas_call(
        _critic_kernel,
        out_shape=jax.ShapeDtypeStruct((B, K), jnp.float32),
        grid=(num_blocks,),
        in_specs=[
            pl.BlockSpec((R, C), lambda i: (i, 0)),                    # x rows
            pl.BlockSpec((R, 1), lambda i: (i, 0)),                    # vehicle mask
            pl.BlockSpec((R, K), lambda i: (i, 0)),                    # customer idx
            pl.BlockSpec((F, C), lambda i: (0, 0), pipeline_mode=weight_mode),  # W1
            pl.BlockSpec((C, F), lambda i: (0, 0), pipeline_mode=weight_mode),  # W2
        ],
        out_specs=pl.BlockSpec((R, K), lambda i: (i, 0)),
        compiler_params=pltpu.CompilerParams(
            dimension_semantics=("parallel",),
            vmem_limit_bytes=vmem_limit),
        cost_estimate=pl.CostEstimate(flops=flops, transcendentals=0,
                                      bytes_accessed=bytes_accessed),
    )(x0, mask0, idx, w1c, w2c)
    return out


def _reference(model_compact, current_vehicle_mask, customer_index, w1, w2):
    compact = jnp.where(current_vehicle_mask[:, :, None],
                        jnp.zeros_like(model_compact), model_compact)
    value = jax.nn.relu(compact @ w1.T) @ w2.T
    return jnp.take_along_axis(value[:, 0, :], customer_index, axis=1)


def _run_case(key, B, S, C, Fh, K, mask_p=0.3):
    k1, k2, k3, k4, k5 = jax.random.split(key, 5)
    model_compact = jax.random.normal(k1, (B, S, C), dtype=jnp.float32)
    current_vehicle_mask = jax.random.bernoulli(k2, mask_p, (B, S))
    customer_index = jax.random.randint(k3, (B, K), 0, C, dtype=jnp.int32)
    bound1 = 1.0 / np.sqrt(C)
    bound2 = 1.0 / np.sqrt(Fh)
    w1 = jax.random.uniform(k4, (Fh, C), jnp.float32, -bound1, bound1)
    w2 = jax.random.uniform(k5, (C, Fh), jnp.float32, -bound2, bound2)
    return model_compact, current_vehicle_mask, customer_index, w1, w2


if __name__ == "__main__":
    key = jax.random.PRNGKey(0)
    key_a, key_b = jax.random.split(key, 2)

    # Case A: small, module-consistent shapes (single row block).
    B, S, C, Fh, K = 2, 8, 16, 32, 8
    mc, mask, idx, w1, w2 = _run_case(key_a, B, S, C, Fh, K)
    ref = _reference(mc, mask, idx, w1, w2)

    out_f32 = jax.block_until_ready(critic_forward(mc, mask, idx, w1, w2))
    np.testing.assert_allclose(np.asarray(out_f32), np.asarray(ref),
                               rtol=1e-5, atol=1e-5)
    assert out_f32.shape == (B, K)

    # bf16 MXU-operand path (v6e/v7x bandwidth optimization) — loose check.
    out_bf16 = jax.block_until_ready(
        critic_forward(mc, mask, idx, w1, w2, compute_dtype=jnp.bfloat16))
    np.testing.assert_allclose(np.asarray(out_bf16), np.asarray(ref),
                               rtol=2e-2, atol=2e-2)

    # Case B: larger batch -> multi-step "parallel" grid (incl. a padded last block).
    B2, S2, C2, Fh2, K2 = 40, 4, 128, 64, 8
    mc2, mask2, idx2, w1b, w2b = _run_case(key_b, B2, S2, C2, Fh2, K2)
    ref2 = _reference(mc2, mask2, idx2, w1b, w2b)
    out2 = jax.block_until_ready(critic_forward(mc2, mask2, idx2, w1b, w2b))
    np.testing.assert_allclose(np.asarray(out2), np.asarray(ref2),
                               rtol=1e-5, atol=1e-4)
    assert out2.shape == (B2, K2)

    print("KERNEL_OK")
</pallas_src>

<mosaic_0001>
module attributes {stable_mosaic.version = 11 : i64} {
  func.func @_critic_kernel(%arg0: i32, %arg1: memref<2x16xf32, #tpu.memory_space<vmem>>, %arg2: memref<2x1xi32, #tpu.memory_space<vmem>>, %arg3: memref<2x8xi32, #tpu.memory_space<vmem>>, %arg4: memref<32x16xf32, #tpu.memory_space<vmem>>, %arg5: memref<16x32xf32, #tpu.memory_space<vmem>>, %arg6: memref<2x8xf32, #tpu.memory_space<vmem>>) attributes {dimension_semantics = [#tpu.dimension_semantics<parallel>], iteration_bounds = array<i64: 1>, scalar_prefetch = 0 : i64, scratch_operands = 0 : i64, tpu.core_type = #tpu.core_type<tc>, window_params = [{transform_indices = @transform_0, window_bounds = array<i64: 2, 16>}, {transform_indices = @transform_1, window_bounds = array<i64: 2, 1>}, {transform_indices = @transform_2, window_bounds = array<i64: 2, 8>}, {pipeline_mode = #tpu.pipeline_mode<synchronous>, transform_indices = @transform_3, window_bounds = array<i64: 32, 16>}, {pipeline_mode = #tpu.pipeline_mode<synchronous>, transform_indices = @transform_4, window_bounds = array<i64: 16, 32>}, {transform_indices = @transform_5, window_bounds = array<i64: 2, 8>}]} {
    %c0 = arith.constant 0 : index
    %c0_0 = arith.constant 0 : index
    %0 = vector.load %arg2[%c0, %c0_0] : memref<2x1xi32, #tpu.memory_space<vmem>>, vector<2x1xi32>
    %c0_i32 = arith.constant 0 : i32
    %1 = vector.broadcast %c0_i32 : i32 to vector<2x1xi32>
    %2 = arith.cmpi ne, %0, %1 : vector<2x1xi32>
    %c0_1 = arith.constant 0 : index
    %c0_2 = arith.constant 0 : index
    %3 = vector.load %arg1[%c0_1, %c0_2] : memref<2x16xf32, #tpu.memory_space<vmem>>, vector<2x16xf32>
    %cst = arith.constant 0.000000e+00 : f32
    %4 = vector.shape_cast %2 : vector<2x1xi1> to vector<2x1xi1>
    %5 = vector.broadcast %4 : vector<2x1xi1> to vector<2x16xi1>
    %6 = vector.broadcast %cst : f32 to vector<2x16xf32>
    %7 = arith.select %5, %6, %3 : vector<2x16xi1>, vector<2x16xf32>
    %c0_3 = arith.constant 0 : index
    %c0_4 = arith.constant 0 : index
    %8 = vector.load %arg4[%c0_3, %c0_4] : memref<32x16xf32, #tpu.memory_space<vmem>>, vector<32x16xf32>
    %cst_5 = arith.constant dense<0.000000e+00> : vector<2x32xf32>
    %9 = tpu.matmul %7, %8, %cst_5 {dimension_numbers = #tpu.dot_dimension_numbers<[1], [1], [0], [0], [0, 0, 1, 0], [], []>} : vector<2x16xf32>, vector<32x16xf32>, vector<2x32xf32> -> vector<2x32xf32>
    %cst_6 = arith.constant 0.000000e+00 : f32
    %10 = vector.broadcast %cst_6 : f32 to vector<2x32xf32>
    %11 = arith.maximumf %9, %10 : vector<2x32xf32>
    %c0_7 = arith.constant 0 : index
    %c0_8 = arith.constant 0 : index
    %12 = vector.load %arg5[%c0_7, %c0_8] : memref<16x32xf32, #tpu.memory_space<vmem>>, vector<16x32xf32>
    %cst_9 = arith.constant dense<0.000000e+00> : vector<2x16xf32>
    %13 = tpu.matmul %11, %12, %cst_9 {dimension_numbers = #tpu.dot_dimension_numbers<[1], [1], [0], [0], [0, 0, 1, 0], [], []>} : vector<2x32xf32>, vector<16x32xf32>, vector<2x16xf32> -> vector<2x16xf32>
    %c0_10 = arith.constant 0 : index
    %c0_11 = arith.constant 0 : index
    %14 = vector.load %arg3[%c0_10, %c0_11] : memref<2x8xi32, #tpu.memory_space<vmem>>, vector<2x8xi32>
    %15 = tpu.iota {dimensions = array<i32: 1>} : vector<2x16xi32>
    %16 = vector.extract_strided_slice %14 {offsets = [0, 0], sizes = [2, 1], strides = [1, 1]} : vector<2x8xi32> to vector<2x1xi32>
    %17 = vector.shape_cast %16 : vector<2x1xi32> to vector<2xi32>
    %18 = vector.shape_cast %17 : vector<2xi32> to vector<2x1xi32>
    %19 = vector.broadcast %18 : vector<2x1xi32> to vector<2x16xi32>
    %20 = arith.cmpi eq, %19, %15 : vector<2x16xi32>
    %cst_12 = arith.constant 0.000000e+00 : f32
    %21 = vector.broadcast %cst_12 : f32 to vector<2x16xf32>
    %22 = arith.select %20, %13, %21 : vector<2x16xi1>, vector<2x16xf32>
    %cst_13 = arith.constant dense<0.000000e+00> : vector<2xf32>
    %23 = vector.multi_reduction <add>, %22, %cst_13 [1] : vector<2x16xf32> to vector<2xf32>
    %24 = vector.shape_cast %23 : vector<2xf32> to vector<2x1xf32>
    %25 = vector.extract_strided_slice %14 {offsets = [0, 1], sizes = [2, 1], strides = [1, 1]} : vector<2x8xi32> to vector<2x1xi32>
    %26 = vector.shape_cast %25 : vector<2x1xi32> to vector<2xi32>
    %27 = vector.shape_cast %26 : vector<2xi32> to vector<2x1xi32>
    %28 = vector.broadcast %27 : vector<2x1xi32> to vector<2x16xi32>
    %29 = arith.cmpi eq, %28, %15 : vector<2x16xi32>
    %cst_14 = arith.constant 0.000000e+00 : f32
    %30 = vector.broadcast %cst_14 : f32 to vector<2x16xf32>
    %31 = arith.select %29, %13, %30 : vector<2x16xi1>, vector<2x16xf32>
    %cst_15 = arith.constant dense<0.000000e+00> : vector<2xf32>
    %32 = vector.multi_reduction <add>, %31, %cst_15 [1] : vector<2x16xf32> to vector<2xf32>
    %33 = vector.shape_cast %32 : vector<2xf32> to vector<2x1xf32>
    %34 = vector.extract_strided_slice %14 {offsets = [0, 2], sizes = [2, 1], strides = [1, 1]} : vector<2x8xi32> to vector<2x1xi32>
    %35 = vector.shape_cast %34 : vector<2x1xi32> to vector<2xi32>
    %36 = vector.shape_cast %35 : vector<2xi32> to vector<2x1xi32>
    %37 = vector.broadcast %36 : vector<2x1xi32> to vector<2x16xi32>
    %38 = arith.cmpi eq, %37, %15 : vector<2x16xi32>
    %cst_16 = arith.constant 0.000000e+00 : f32
    %39 = vector.broadcast %cst_16 : f32 to vector<2x16xf32>
    %40 = arith.select %38, %13, %39 : vector<2x16xi1>, vector<2x16xf32>
    %cst_17 = arith.constant dense<0.000000e+00> : vector<2xf32>
    %41 = vector.multi_reduction <add>, %40, %cst_17 [1] : vector<2x16xf32> to vector<2xf32>
    %42 = vector.shape_cast %41 : vector<2xf32> to vector<2x1xf32>
    %43 = vector.extract_strided_slice %14 {offsets = [0, 3], sizes = [2, 1], strides = [1, 1]} : vector<2x8xi32> to vector<2x1xi32>
    %44 = vector.shape_cast %43 : vector<2x1xi32> to vector<2xi32>
    %45 = vector.shape_cast %44 : vector<2xi32> to vector<2x1xi32>
    %46 = vector.broadcast %45 : vector<2x1xi32> to vector<2x16xi32>
    %47 = arith.cmpi eq, %46, %15 : vector<2x16xi32>
    %cst_18 = arith.constant 0.000000e+00 : f32
    %48 = vector.broadcast %cst_18 : f32 to vector<2x16xf32>
    %49 = arith.select %47, %13, %48 : vector<2x16xi1>, vector<2x16xf32>
    %cst_19 = arith.constant dense<0.000000e+00> : vector<2xf32>
    %50 = vector.multi_reduction <add>, %49, %cst_19 [1] : vector<2x16xf32> to vector<2xf32>
    %51 = vector.shape_cast %50 : vector<2xf32> to vector<2x1xf32>
    %52 = vector.extract_strided_slice %14 {offsets = [0, 4], sizes = [2, 1], strides = [1, 1]} : vector<2x8xi32> to vector<2x1xi32>
    %53 = vector.shape_cast %52 : vector<2x1xi32> to vector<2xi32>
    %54 = vector.shape_cast %53 : vector<2xi32> to vector<2x1xi32>
    %55 = vector.broadcast %54 : vector<2x1xi32> to vector<2x16xi32>
    %56 = arith.cmpi eq, %55, %15 : vector<2x16xi32>
    %cst_20 = arith.constant 0.000000e+00 : f32
    %57 = vector.broadcast %cst_20 : f32 to vector<2x16xf32>
    %58 = arith.select %56, %13, %57 : vector<2x16xi1>, vector<2x16xf32>
    %cst_21 = arith.constant dense<0.000000e+00> : vector<2xf32>
    %59 = vector.multi_reduction <add>, %58, %cst_21 [1] : vector<2x16xf32> to vector<2xf32>
    %60 = vector.shape_cast %59 : vector<2xf32> to vector<2x1xf32>
    %61 = vector.extract_strided_slice %14 {offsets = [0, 5], sizes = [2, 1], strides = [1, 1]} : vector<2x8xi32> to vector<2x1xi32>
    %62 = vector.shape_cast %61 : vector<2x1xi32> to vector<2xi32>
    %63 = vector.shape_cast %62 : vector<2xi32> to vector<2x1xi32>
    %64 = vector.broadcast %63 : vector<2x1xi32> to vector<2x16xi32>
    %65 = arith.cmpi eq, %64, %15 : vector<2x16xi32>
    %cst_22 = arith.constant 0.000000e+00 : f32
    %66 = vector.broadcast %cst_22 : f32 to vector<2x16xf32>
    %67 = arith.select %65, %13, %66 : vector<2x16xi1>, vector<2x16xf32>
    %cst_23 = arith.constant dense<0.000000e+00> : vector<2xf32>
    %68 = vector.multi_reduction <add>, %67, %cst_23 [1] : vector<2x16xf32> to vector<2xf32>
    %69 = vector.shape_cast %68 : vector<2xf32> to vector<2x1xf32>
    %70 = vector.extract_strided_slice %14 {offsets = [0, 6], sizes = [2, 1], strides = [1, 1]} : vector<2x8xi32> to vector<2x1xi32>
    %71 = vector.shape_cast %70 : vector<2x1xi32> to vector<2xi32>
    %72 = vector.shape_cast %71 : vector<2xi32> to vector<2x1xi32>
    %73 = vector.broadcast %72 : vector<2x1xi32> to vector<2x16xi32>
    %74 = arith.cmpi eq, %73, %15 : vector<2x16xi32>
    %cst_24 = arith.constant 0.000000e+00 : f32
    %75 = vector.broadcast %cst_24 : f32 to vector<2x16xf32>
    %76 = arith.select %74, %13, %75 : vector<2x16xi1>, vector<2x16xf32>
    %cst_25 = arith.constant dense<0.000000e+00> : vector<2xf32>
    %77 = vector.multi_reduction <add>, %76, %cst_25 [1] : vector<2x16xf32> to vector<2xf32>
    %78 = vector.shape_cast %77 : vector<2xf32> to vector<2x1xf32>
    %79 = vector.extract_strided_slice %14 {offsets = [0, 7], sizes = [2, 1], strides = [1, 1]} : vector<2x8xi32> to vector<2x1xi32>
    %80 = vector.shape_cast %79 : vector<2x1xi32> to vector<2xi32>
    %81 = vector.shape_cast %80 : vector<2xi32> to vector<2x1xi32>
    %82 = vector.broadcast %81 : vector<2x1xi32> to vector<2x16xi32>
    %83 = arith.cmpi eq, %82, %15 : vector<2x16xi32>
    %cst_26 = arith.constant 0.000000e+00 : f32
    %84 = vector.broadcast %cst_26 : f32 to vector<2x16xf32>
    %85 = arith.select %83, %13, %84 : vector<2x16xi1>, vector<2x16xf32>
    %cst_27 = arith.constant dense<0.000000e+00> : vector<2xf32>
    %86 = vector.multi_reduction <add>, %85, %cst_27 [1] : vector<2x16xf32> to vector<2xf32>
    %87 = vector.shape_cast %86 : vector<2xf32> to vector<2x1xf32>
    %88 = tpu.concatenate %24, %33, %42, %51, %60, %69, %78, %87 in 1 : vector<2x1xf32>, vector<2x1xf32>, vector<2x1xf32>, vector<2x1xf32>, vector<2x1xf32>, vector<2x1xf32>, vector<2x1xf32>, vector<2x1xf32> -> vector<2x8xf32>
    %c0_28 = arith.constant 0 : index
    %c0_29 = arith.constant 0 : index
    %89 = vector.load %arg6[%c0_28, %c0_29] : memref<2x8xf32, #tpu.memory_space<vmem>>, vector<2x8xf32>
    tpu.vector_store %arg6[%c0_28, %c0_29], %88 {strides = array<i32>} : memref<2x8xf32, #tpu.memory_space<vmem>>, vector<2x8xf32>,
    return
  }
  func.func @transform_0(%arg0: i32) -> (i32, i32) {
    %c0_i32 = arith.constant 0 : i32
    %c0_i32_0 = arith.constant 0 : i32
    return %arg0, %c0_i32 : i32, i32
  }
  func.func @transform_1(%arg0: i32) -> (i32, i32) {
    %c0_i32 = arith.constant 0 : i32
    %c0_i32_0 = arith.constant 0 : i32
    return %arg0, %c0_i32 : i32, i32
  }
  func.func @transform_2(%arg0: i32) -> (i32, i32) {
    %c0_i32 = arith.constant 0 : i32
    %c0_i32_0 = arith.constant 0 : i32
    return %arg0, %c0_i32 : i32, i32
  }
  func.func @transform_3(%arg0: i32) -> (i32, i32) {
    %c0_i32 = arith.constant 0 : i32
    %c0_i32_0 = arith.constant 0 : i32
    %c0_i32_1 = arith.constant 0 : i32
    return %c0_i32, %c0_i32_0 : i32, i32
  }
  func.func @transform_4(%arg0: i32) -> (i32, i32) {
    %c0_i32 = arith.constant 0 : i32
    %c0_i32_0 = arith.constant 0 : i32
    %c0_i32_1 = arith.constant 0 : i32
    return %c0_i32, %c0_i32_0 : i32, i32
  }
  func.func @transform_5(%arg0: i32) -> (i32, i32) {
    %c0_i32 = arith.constant 0 : i32
    %c0_i32_0 = arith.constant 0 : i32
    return %arg0, %c0_i32 : i32, i32
  }
}

</mosaic_0001>

<llo_original>
// kernel: tpu_custom_call.1
$region0: #{tpu_custom_call.1}
  #allocation0 [shape = 'u32[]', space=smem, size = 0x4, offset = 0x4, fixed_abs, tag = 'smem constant byte address 0x4 - core index']
  #allocation1 [shape = 'u32[144,128]{1,0:T(1,128)}', space=vmem, size = 0x12000, scoped, tag = 'internal scratch']
  %s0 = inlined_call_operand.vmem [shape: f32[2,16], index: 0, kind: input, shape index: {}]
  %s1 = inlined_call_operand.vmem [shape: s32[2,1], index: 1, kind: input, shape index: {}]
  %s2 = inlined_call_operand.vmem [shape: s32[2,8], index: 2, kind: input, shape index: {}]
  %s3 = inlined_call_operand.vmem [shape: f32[32,16], index: 3, kind: input, shape index: {}]
  %s4 = inlined_call_operand.vmem [shape: f32[16,32], index: 4, kind: input, shape index: {}]
  %s5 = inlined_call_operand.hbm [shape: f32[2,8], index: 5, kind: output, shape index: {}]
  %s6 = sld [smem:[#allocation0]]
  $region30: #{tpu_custom_call.1} parent=0
    _
  %s8 = ssub.s32 1, %s6
  %s9 = scalar_select 0, %s8, %s6
  $region1: #{tpu_custom_call.1} parent=0
    #allocation2 [shape = 'u8[1024]{0}', space=vmem, size = 0x400, scoped, tag = 'output window, operand 0, single buffered']
    #allocation3 [shape = 's32[1]{0}', space=sflag, size = 0x4, scoped, tag = 'scoped memory for tpu_custom_call.1']
    %10 = vsyncpa [#allocation3], 0
    // Predicated region
    $region2: #{tpu_custom_call.1} parent=1 // pred_check
      _
    $region3: #{tpu_custom_call.1} parent=1 // pred_check_branch
      %12 = sbr.rel (0) target = $region5
    $region4: #{tpu_custom_call.1} parent=1 // pred_region
      _
    $region5: #{tpu_custom_call.1} parent=1 // pred_fallthru
      _
    // Predicated region
    $region6: #{tpu_custom_call.1} parent=1 // pred_check
      _
    $region7: #{tpu_custom_call.1} parent=1 // pred_check_branch
      %14 = sbr.rel (0) target = $region9
    $region8: #{tpu_custom_call.1} parent=1 // pred_region
      _
    $region9: #{tpu_custom_call.1} parent=1 // pred_fallthru
      _
    // Predicated region
    $region10: #{tpu_custom_call.1} parent=1 // pred_check
      _
    $region11: #{tpu_custom_call.1} parent=1 // pred_check_branch
      %16 = sbr.rel (0) target = $region13
    $region12: #{tpu_custom_call.1} parent=1 // pred_region
      _
    $region13: #{tpu_custom_call.1} parent=1 // pred_fallthru
      _
    // Predicated region
    $region14: #{tpu_custom_call.1} parent=1 // pred_check
      _
    $region15: #{tpu_custom_call.1} parent=1 // pred_check_branch
      %18 = sbr.rel (0) target = $region17
    $region16: #{tpu_custom_call.1} parent=1 // pred_region
      _
    $region17: #{tpu_custom_call.1} parent=1 // pred_fallthru
      _
    // Predicated region
    $region18: #{tpu_custom_call.1} parent=1 // pred_check
      _
    $region19: #{tpu_custom_call.1} parent=1 // pred_check_branch
      %20 = sbr.rel (0) target = $region21
    $region20: #{tpu_custom_call.1} parent=1 // pred_region
      _
    $region21: #{tpu_custom_call.1} parent=1 // pred_fallthru
      _
    %v21 = vld [vmem:[%s1] sm:$0x3]
    %vm22 = vcmp.ne.s32.totalorder %v21, 0
    %v23 = vld [vmem:[%s0] sm:$0x3]
    %v24 = vsel %vm22, 1, 0
    %25 = vset.pattern.permute.xlu0 0
    %26 = vperm.xlu0 %25, %v24
    %v27 = vpop.permute.xlu0 %26
    %vm28 = vcmp.eq.s32.totalorder %v27, 1
    %v29 = vsel %vm28, 0.0, %v23
    %v30 = vld [vmem:[%s3] sm:$0xff]
    %v31 = vld [vmem:[%s3 + $0x8] sm:$0xff]
    %v32 = vld [vmem:[%s3 + $0x10] sm:$0xff]
    %v33 = vld [vmem:[%s3 + $0x18] sm:$0xff]
    %vm34 = vcmask 130048
    %v36 = vsel %vm34, %v29, 0
    %v39 = vsel %vm34, %v30, 0
    %v42 = vsel %vm34, %v31, 0
    %v45 = vsel %vm34, %v32, 0
    %v48 = vsel %vm34, %v33, 0
    %50 = vmatprep.subr.mxu0 0.0
    %51 = vmatpush1.xpose.msra.mxu0 0.0
    %52 = vmatprep.subr.mxu0 0.0
    %53 = vmatpush1.xpose.msra.mxu0 0.0
    %54 = vmatprep.subr.mxu0 0.0
    %55 = vmatpush1.xpose.msra.mxu0 0.0
    %56 = vmatprep.subr.mxu0 0.0
    %57 = vmatpush1.xpose.msra.mxu0 0.0
    %58 = vmatprep.subr.mxu0 0.0
    %59 = vmatpush1.xpose.msra.mxu0 0.0
    %60 = vmatprep.subr.mxu0 0.0
    %61 = vmatpush1.xpose.msra.mxu0 0.0
    %62 = vmatprep.subr.mxu0 0.0
    %63 = vmatpush1.xpose.msra.mxu0 0.0
    %64 = vmatprep.subr.mxu0 0.0
    %65 = vmatpush1.xpose.msra.mxu0 0.0
    %66 = vmatprep.subr.mxu0 0.0
    %67 = vmatpush1.xpose.msra.mxu0 0.0
    %68 = vmatprep.subr.mxu0 0.0
    %69 = vmatpush1.xpose.msra.mxu0 0.0
    %70 = vmatprep.subr.mxu0 0.0
    %71 = vmatpush1.xpose.msra.mxu0 0.0
    %72 = vmatprep.subr.mxu0 0.0
    %73 = vmatpush1.xpose.msra.mxu0 0.0
    %74 = vmatprep.subr.mxu0 0.0
    %75 = vmatpush1.xpose.msra.mxu0 %v48
    %76 = vmatprep.subr.mxu0 0.0
    %77 = vmatpush1.xpose.msra.mxu0 %v45
    %78 = vmatprep.subr.mxu0 0.0
    %79 = vmatpush1.xpose.msra.mxu0 %v42
    %80 = vmatprep.subr.mxu0 0.0
    %81 = vmatpush1.xpose.msra.mxu0 %v39
    %82 = vmatprep.subr.mxu0 0.0
    %83 = vmatpush2.xpose.msra.mxu0 0.0
    %84 = vmatprep.subr.mxu0 0.0
    %85 = vmatpush2.xpose.msra.mxu0 0.0
    %86 = vmatprep.subr.mxu0 0.0
    %87 = vmatpush2.xpose.msra.mxu0 0.0
    %88 = vmatprep.subr.mxu0 0.0
    %89 = vmatpush2.xpose.msra.mxu0 0.0
    %90 = vmatprep.subr.mxu0 0.0
    %91 = vmatpush2.xpose.msra.mxu0 0.0
    %92 = vmatprep.subr.mxu0 0.0
    %93 = vmatpush2.xpose.msra.mxu0 0.0
    %94 = vmatprep.subr.mxu0 0.0
    %95 = vmatpush2.xpose.msra.mxu0 0.0
    %96 = vmatprep.subr.mxu0 0.0
    %97 = vmatpush2.xpose.msra.mxu0 0.0
    %98 = vmatprep.subr.mxu0 0.0
    %99 = vmatpush2.xpose.msra.mxu0 0.0
    %100 = vmatprep.subr.mxu0 0.0
    %101 = vmatpush2.xpose.msra.mxu0 0.0
    %102 = vmatprep.subr.mxu0 0.0
    %103 = vmatpush2.xpose.msra.mxu0 0.0
    %104 = vmatprep.subr.mxu0 0.0
    %105 = vmatpush2.xpose.msra.mxu0 0.0
    %106 = vmatprep.subr.mxu0 0.0
    %107 = vmatpush2.xpose.msra.mxu0 0.0
    %108 = vmatprep.subr.mxu0 0.0
    %109 = vmatpush2.xpose.msra.mxu0 0.0
    %110 = vmatprep.subr.mxu0 0.0
    %111 = vmatpush2.xpose.msra.mxu0 0.0
    %112 = vmatprep.subr.mxu0 0.0
    %113 = vmatpush2.xpose.msra.mxu0 0.0
    %114 = vmatprep.mubr.f32.mxu0 0.0
    %115 = vmatmul.mubr.f32.gmra.mxu0 %v36
    %v116 = vpop.f32.mrf.mxu0
    %v117 = vadd.f32 0.0, %v116
    %v118 = vpop.f32.mrf.mxu0
    %119 = vdwg.mxu0
    %v120 = vmax.f32 %v117, 0.0
    %v121 = vld [vmem:[%s4] sm:$0xff]
    %v122 = vld [vmem:[%s4 + $0x8] sm:$0xff]
    %vm123 = vcmask 261120
    %v125 = vsel %vm123, %v120, 0
    %v128 = vsel %vm123, %v121, 0
    %v131 = vsel %vm123, %v122, 0
    %133 = vmatprep.subr.mxu0 0.0
    %134 = vmatpush1.xpose.msra.mxu0 0.0
    %135 = vmatprep.subr.mxu0 0.0
    %136 = vmatpush1.xpose.msra.mxu0 0.0
    %137 = vmatprep.subr.mxu0 0.0
    %138 = vmatpush1.xpose.msra.mxu0 0.0
    %139 = vmatprep.subr.mxu0 0.0
    %140 = vmatpush1.xpose.msra.mxu0 0.0
    %141 = vmatprep.subr.mxu0 0.0
    %142 = vmatpush1.xpose.msra.mxu0 0.0
    %143 = vmatprep.subr.mxu0 0.0
    %144 = vmatpush1.xpose.msra.mxu0 0.0
    %145 = vmatprep.subr.mxu0 0.0
    %146 = vmatpush1.xpose.msra.mxu0 0.0
    %147 = vmatprep.subr.mxu0 0.0
    %148 = vmatpush1.xpose.msra.mxu0 0.0
    %149 = vmatprep.subr.mxu0 0.0
    %150 = vmatpush1.xpose.msra.mxu0 0.0
    %151 = vmatprep.subr.mxu0 0.0
    %152 = vmatpush1.xpose.msra.mxu0 0.0
    %153 = vmatprep.subr.mxu0 0.0
    %154 = vmatpush1.xpose.msra.mxu0 0.0
    %155 = vmatprep.subr.mxu0 0.0
    %156 = vmatpush1.xpose.msra.mxu0 0.0
    %157 = vmatprep.subr.mxu0 0.0
    %158 = vmatpush1.xpose.msra.mxu0 0.0
    %159 = vmatprep.subr.mxu0 0.0
    %160 = vmatpush1.xpose.msra.mxu0 0.0
    %161 = vmatprep.subr.mxu0 0.0
    %162 = vmatpush1.xpose.msra.mxu0 %v131
    %163 = vmatprep.subr.mxu0 0.0
    %164 = vmatpush1.xpose.msra.mxu0 %v128
    %165 = vmatprep.subr.mxu0 0.0
    %166 = vmatpush2.xpose.msra.mxu0 0.0
    %167 = vmatprep.subr.mxu0 0.0
    %168 = vmatpush2.xpose.msra.mxu0 0.0
    %169 = vmatprep.subr.mxu0 0.0
    %170 = vmatpush2.xpose.msra.mxu0 0.0
    %171 = vmatprep.subr.mxu0 0.0
    %172 = vmatpush2.xpose.msra.mxu0 0.0
    %173 = vmatprep.subr.mxu0 0.0
    %174 = vmatpush2.xpose.msra.mxu0 0.0
    %175 = vmatprep.subr.mxu0 0.0
    %176 = vmatpush2.xpose.msra.mxu0 0.0
    %177 = vmatprep.subr.mxu0 0.0
    %178 = vmatpush2.xpose.msra.mxu0 0.0
    %179 = vmatprep.subr.mxu0 0.0
    %180 = vmatpush2.xpose.msra.mxu0 0.0
    %181 = vmatprep.subr.mxu0 0.0
    %182 = vmatpush2.xpose.msra.mxu0 0.0
    %183 = vmatprep.subr.mxu0 0.0
    %184 = vmatpush2.xpose.msra.mxu0 0.0
    %185 = vmatprep.subr.mxu0 0.0
    %186 = vmatpush2.xpose.msra.mxu0 0.0
    %187 = vmatprep.subr.mxu0 0.0
    %188 = vmatpush2.xpose.msra.mxu0 0.0
    %189 = vmatprep.subr.mxu0 0.0
    %190 = vmatpush2.xpose.msra.mxu0 0.0
    %191 = vmatprep.subr.mxu0 0.0
    %192 = vmatpush2.xpose.msra.mxu0 0.0
    %193 = vmatprep.subr.mxu0 0.0
    %194 = vmatpush2.xpose.msra.mxu0 0.0
    %195 = vmatprep.subr.mxu0 0.0
    %196 = vmatpush2.xpose.msra.mxu0 0.0
    %197 = vmatprep.mubr.f32.mxu0 0.0
    %198 = vmatmul.mubr.f32.gmra.mxu0 %v125
    %v199 = vpop.f32.mrf.mxu0
    %v200 = vadd.f32 0.0, %v199
    %v201 = vpop.f32.mrf.mxu0
    %202 = vdwg.mxu0
    %v203 = vld [vmem:[%s2] sm:$0x3]
    %v204 = vlaneseq
    %v205 = vand.u32 %v204, 127
    %206 = vset.pattern.permute.xlu0 0
    %207 = vperm.xlu0 %206, %v203
    %v208 = vpop.permute.xlu0 %207
    %vm209 = vcmp.eq.s32.totalorder %v208, %v205
    %v210 = vsel %vm209, %v200, 0.0
    %vm211 = vcmask 123904
    %v212 = vsel %vm211, %v210, 0.0
    %213 = vadd.xlane.f32.xlu0 %v212
    %v214 = vpop.xlane.xlu0 %213
    %215 = vset.pattern.permute.xlu0 1
    %216 = vperm.xlu0 %215, %v203
    %v217 = vpop.permute.xlu0 %216
    %vm218 = vcmp.eq.s32.totalorder %v217, %v205
    %v219 = vsel %vm218, %v200, 0.0
    %v220 = vsel %vm211, %v219, 0.0
    %221 = vadd.xlane.f32.xlu0 %v220
    %v222 = vpop.xlane.xlu0 %221
    %223 = vset.pattern.permute.xlu0 2
    %224 = vperm.xlu0 %223, %v203
    %v225 = vpop.permute.xlu0 %224
    %vm226 = vcmp.eq.s32.totalorder %v225, %v205
    %v227 = vsel %vm226, %v200, 0.0
    %v228 = vsel %vm211, %v227, 0.0
    %229 = vadd.xlane.f32.xlu0 %v228
    %v230 = vpop.xlane.xlu0 %229
    %231 = vset.pattern.permute.xlu0 3
    %232 = vperm.xlu0 %231, %v203
    %v233 = vpop.permute.xlu0 %232
    %vm234 = vcmp.eq.s32.totalorder %v233, %v205
    %v235 = vsel %vm234, %v200, 0.0
    %v236 = vsel %vm211, %v235, 0.0
    %237 = vadd.xlane.f32.xlu0 %v236
    %v238 = vpop.xlane.xlu0 %237
    %239 = vset.pattern.permute.xlu0 4
    %240 = vperm.xlu0 %239, %v203
    %v241 = vpop.permute.xlu0 %240
    %vm242 = vcmp.eq.s32.totalorder %v241, %v205
    %v243 = vsel %vm242, %v200, 0.0
    %v244 = vsel %vm211, %v243, 0.0
    %245 = vadd.xlane.f32.xlu0 %v244
    %v246 = vpop.xlane.xlu0 %245
    %247 = vset.pattern.permute.xlu0 5
    %248 = vperm.xlu0 %247, %v203
    %v249 = vpop.permute.xlu0 %248
    %vm250 = vcmp.eq.s32.totalorder %v249, %v205
    %v251 = vsel %vm250, %v200, 0.0
    %v252 = vsel %vm211, %v251, 0.0
    %253 = vadd.xlane.f32.xlu0 %v252
    %v254 = vpop.xlane.xlu0 %253
    %255 = vset.pattern.permute.xlu0 6
    %256 = vperm.xlu0 %255, %v203
    %v257 = vpop.permute.xlu0 %256
    %vm258 = vcmp.eq.s32.totalorder %v257, %v205
    %v259 = vsel %vm258, %v200, 0.0
    %v260 = vsel %vm211, %v259, 0.0
    %261 = vadd.xlane.f32.xlu0 %v260
    %v262 = vpop.xlane.xlu0 %261
    %263 = vset.pattern.permute.xlu0 7
    %264 = vperm.xlu0 %263, %v203
    %v265 = vpop.permute.xlu0 %264
    %vm266 = vcmp.eq.s32.totalorder %v265, %v205
    %v267 = vsel %vm266, %v200, 0.0
    %v268 = vsel %vm211, %v267, 0.0
    %269 = vadd.xlane.f32.xlu0 %v268
    %v270 = vpop.xlane.xlu0 %269
    %vm271 = vcmask 7168
    %v272 = vsel %vm271, %v214, %v222
    %vm273 = vcmask 15360
    %v274 = vsel %vm273, %v272, %v230
    %vm275 = vcmask 23552
    %v276 = vsel %vm275, %v274, %v238
    %vm277 = vcmask 31744
    %v278 = vsel %vm277, %v276, %v246
    %vm279 = vcmask 39936
    %v280 = vsel %vm279, %v278, %v254
    %vm281 = vcmask 48128
    %v282 = vsel %vm281, %v280, %v262
    %vm283 = vcmask 56320
    %v284 = vsel %vm283, %v282, %v270
    %vm285 = vcmask 58368
    %286 = vst.msk [vmem:[#allocation2] sm:$0x3] %vm285, %v284
    // Predicated region
    $region22: #{tpu_custom_call.1} parent=1 // pred_check
      _
    $region23: #{tpu_custom_call.1} parent=1 // pred_check_branch
      %288 = sbr.rel (0) target = $region25
    $region24: #{tpu_custom_call.1} parent=1 // pred_region
      %s290 = ssub.s32 32, 32
      %291 = vsyncadd [#allocation3], %s290
      %s293 = sshll.u32 [#allocation2], 4
      %s294 = int_to_ptr.vmem [resolvable:$true] %s293
      %296 = dma.vmem_to_hbm [thread:$0]  %s294, 32, %s5, [#allocation3]
    $region25: #{tpu_custom_call.1} parent=1 // pred_fallthru
      _
    // Predicated region
    $region26: #{tpu_custom_call.1} parent=1 // pred_check
      _
    $region27: #{tpu_custom_call.1} parent=1 // pred_check_branch
      %298 = sbr.rel (0) target = $region29
    $region28: #{tpu_custom_call.1} parent=1 // pred_region
      %299 = dma.done [#allocation3], 32
    $region29: #{tpu_custom_call.1} parent=1 // pred_fallthru
      _
    %300 = vsyncpa [#allocation3], 1

</llo_original>
